<compile_context>
chip_gen: v7x
topology: tpu7x:2x2x1
jax: 0.10.0
libtpu: 0.0.40
codegen_flags: <defaults>
</compile_context>

<pallas_src>
import jax
import jax.numpy as jnp
from jax import lax
from jax.experimental import pallas as pl
from jax.experimental.pallas import tpu as pltpu

GAMMA = 6  # module default; integer power -> repeated VPU multiplies (no EUP pow)


def focal_loss_kernel(x_ref, t_ref, out_ref):
    # x_ref:   (1, C, TL)  log-probabilities (cast to f32 in-kernel)
    # t_ref:   (1, 1, TL)  int32 class ids
    # out_ref: (1, 1, TL)  f32 per-lane partial loss sums, resident across axis 1
    j = pl.program_id(1)

    @pl.when(j == 0)
    def _():
        out_ref[...] = jnp.zeros_like(out_ref)

    x = x_ref[0].astype(jnp.float32)                      # (C, TL)
    t = t_ref[0]                                          # (1, TL) int32
    cls = lax.broadcasted_iota(jnp.int32, x.shape, 0)     # class id per sublane row
    onehot = cls == t                                     # (C, TL)
    # gather(input, 1, target): pick the target-class log-prob per pixel.
    # NOTE: out-of-range targets (e.g. ignore_index) would map to loss=0 and
    # still count in the mean; targets are assumed to lie in [0, C).
    logpt = jnp.sum(jnp.where(onehot, x, 0.0), axis=0, keepdims=True)  # (1, TL)
    pt = jnp.exp(logpt)
    # TODO(synk): alpha-weighting branch (alpha gather) omitted — module default alpha=None.
    loss = -1.0 * (1.0 - pt) ** GAMMA * logpt             # (1, TL)
    out_ref[...] += loss[None]                            # elementwise f32 accumulation


def _pick_tl(hw, c):
    """Largest pixel tile (multiple of 128 dividing HW) under a VMEM budget."""
    cap = max(128, (8 << 20) // (4 * max(c, 1)))  # ~8 MiB per (C, TL) f32 tile
    if hw <= cap:
        return hw                 # full-extent block is always layout-legal
    if hw % 128 != 0:
        # TODO(synk): pad HW to a multiple of 128 for huge non-aligned inputs.
        return hw
    best, t = 128, 128
    while t <= cap:
        if hw % t == 0:
            best = t
        t += 128
    return best


def focal_loss(inp, target):
    """inp: (N, C, H, W) log-probs; target: (N, 1, H, W) int class ids."""
    N, C, H, W = inp.shape
    HW = H * W
    x = inp.reshape(N, C, HW)          # free view of NCHW — no transpose pass
    t = target.reshape(N, 1, HW)
    if t.dtype != jnp.int32:
        t = t.astype(jnp.int32)

    TL = _pick_tl(HW, C)
    grid = (N, HW // TL)

    partial = pl.pallas_call(
        focal_loss_kernel,
        out_shape=jax.ShapeDtypeStruct((N, 1, TL), jnp.float32),
        grid_spec=pltpu.PrefetchScalarGridSpec(
            num_scalar_prefetch=0,
            grid=grid,
            in_specs=[
                pl.BlockSpec((1, C, TL), lambda n, j: (n, 0, j)),
                pl.BlockSpec((1, 1, TL), lambda n, j: (n, 0, j)),
            ],
            out_specs=pl.BlockSpec((1, 1, TL), lambda n, j: (n, 0, 0)),
        ),
        compiler_params=pltpu.CompilerParams(
            dimension_semantics=("parallel", "arbitrary")),
    )(x, t)

    # size_average=True -> mean over all N*H*W pixels (tiny XLA reduce).
    return jnp.sum(partial) / jnp.float32(N * HW)


def focal_loss_ref(inp, target):
    """Pure-JAX reference mirroring the PyTorch forward."""
    N, C, H, W = inp.shape
    x = jnp.transpose(inp, (0, 2, 3, 1)).reshape(-1, C).astype(jnp.float32)
    t = target.reshape(-1).astype(jnp.int32)
    logpt = jnp.take_along_axis(x, t[:, None], axis=1)[:, 0]
    pt = jnp.exp(logpt)
    loss = -1.0 * (1.0 - pt) ** GAMMA * logpt
    return jnp.mean(loss)


if __name__ == "__main__":
    N, C, H, W = 2, 4, 16, 16
    key = jax.random.PRNGKey(0)
    k1, k2 = jax.random.split(key)

    logits = jax.random.normal(k1, (N, C, H, W), dtype=jnp.float32)
    log_probs = jax.nn.log_softmax(logits, axis=1)           # NCHW log-probabilities
    target = jax.random.randint(k2, (N, 1, H, W), 0, C, dtype=jnp.int32)

    out = jax.block_until_ready(focal_loss(log_probs, target))
    ref = jax.block_until_ready(focal_loss_ref(log_probs, target))

    assert jnp.allclose(out, ref, rtol=1e-5, atol=1e-6), (out, ref)
    print("KERNEL_OK")
</pallas_src>

<mosaic_0001>
module attributes {stable_mosaic.version = 11 : i64} {
  func.func @focal_loss_kernel(%arg0: i32, %arg1: i32, %arg2: memref<1x4x256xf32, #tpu.memory_space<vmem>>, %arg3: memref<1x1x256xi32, #tpu.memory_space<vmem>>, %arg4: memref<1x1x256xf32, #tpu.memory_space<vmem>>) attributes {dimension_semantics = [#tpu.dimension_semantics<parallel>, #tpu.dimension_semantics<arbitrary>], iteration_bounds = array<i64: 2, 1>, scalar_prefetch = 0 : i64, scratch_operands = 0 : i64, tpu.core_type = #tpu.core_type<tc>, window_params = [{transform_indices = @transform_0, window_bounds = array<i64: 1, 4, 256>}, {transform_indices = @transform_1, window_bounds = array<i64: 1, 1, 256>}, {transform_indices = @transform_2, window_bounds = array<i64: 1, 1, 256>}]} {
    %c0_i32 = arith.constant 0 : i32
    %0 = arith.cmpi eq, %arg1, %c0_i32 : i32
    %1 = arith.extui %0 : i1 to i32
    %c0_i32_0 = arith.constant 0 : i32
    %2 = arith.cmpi ne, %1, %c0_i32_0 : i32
    scf.if %2 {
      %cst_15 = arith.constant 0.000000e+00 : f32
      %27 = vector.broadcast %cst_15 : f32 to vector<1x1x256xf32>
      %c0_16 = arith.constant 0 : index
      %c0_17 = arith.constant 0 : index
      %c0_18 = arith.constant 0 : index
      %28 = vector.load %arg4[%c0_16, %c0_17, %c0_18] : memref<1x1x256xf32, #tpu.memory_space<vmem>>, vector<1x1x256xf32>
      tpu.vector_store %arg4[%c0_16, %c0_17, %c0_18], %27 {strides = array<i32>} : memref<1x1x256xf32, #tpu.memory_space<vmem>>, vector<1x1x256xf32>,
    } else {
    }
    %c0 = arith.constant 0 : index
    %c0_1 = arith.constant 0 : index
    %c0_2 = arith.constant 0 : index
    %3 = vector.load %arg2[%c0, %c0_1, %c0_2] : memref<1x4x256xf32, #tpu.memory_space<vmem>>, vector<1x4x256xf32>
    %4 = vector.shape_cast %3 : vector<1x4x256xf32> to vector<4x256xf32>
    %c0_3 = arith.constant 0 : index
    %c0_4 = arith.constant 0 : index
    %c0_5 = arith.constant 0 : index
    %5 = vector.load %arg3[%c0_3, %c0_4, %c0_5] : memref<1x1x256xi32, #tpu.memory_space<vmem>>, vector<1x1x256xi32>
    %6 = vector.shape_cast %5 : vector<1x1x256xi32> to vector<1x256xi32>
    %7 = tpu.iota {dimensions = array<i32: 0>} : vector<4x256xi32>
    %8 = vector.broadcast %6 : vector<1x256xi32> to vector<4x256xi32>
    %9 = arith.cmpi eq, %7, %8 : vector<4x256xi32>
    %cst = arith.constant 0.000000e+00 : f32
    %10 = vector.broadcast %cst : f32 to vector<4x256xf32>
    %11 = arith.select %9, %4, %10 : vector<4x256xi1>, vector<4x256xf32>
    %cst_6 = arith.constant dense<0.000000e+00> : vector<256xf32>
    %12 = vector.multi_reduction <add>, %11, %cst_6 [0] : vector<4x256xf32> to vector<256xf32>
    %13 = vector.shape_cast %12 : vector<256xf32> to vector<1x256xf32>
    %14 = math.exp %13 : vector<1x256xf32>
    %cst_7 = arith.constant 1.000000e+00 : f32
    %15 = vector.broadcast %cst_7 : f32 to vector<1x256xf32>
    %16 = arith.subf %15, %14 : vector<1x256xf32>
    %17 = arith.mulf %16, %16 : vector<1x256xf32>
    %18 = arith.mulf %17, %17 : vector<1x256xf32>
    %19 = arith.mulf %17, %18 : vector<1x256xf32>
    %cst_8 = arith.constant -1.000000e+00 : f32
    %20 = vector.broadcast %cst_8 : f32 to vector<1x256xf32>
    %21 = arith.mulf %20, %19 : vector<1x256xf32>
    %22 = arith.mulf %21, %13 : vector<1x256xf32>
    %c0_9 = arith.constant 0 : index
    %c0_10 = arith.constant 0 : index
    %c0_11 = arith.constant 0 : index
    %23 = vector.load %arg4[%c0_9, %c0_10, %c0_11] : memref<1x1x256xf32, #tpu.memory_space<vmem>>, vector<1x1x256xf32>
    %24 = vector.shape_cast %22 : vector<1x256xf32> to vector<1x1x256xf32>
    %25 = arith.addf %23, %24 : vector<1x1x256xf32>
    %c0_12 = arith.constant 0 : index
    %c0_13 = arith.constant 0 : index
    %c0_14 = arith.constant 0 : index
    %26 = vector.load %arg4[%c0_12, %c0_13, %c0_14] : memref<1x1x256xf32, #tpu.memory_space<vmem>>, vector<1x1x256xf32>
    tpu.vector_store %arg4[%c0_12, %c0_13, %c0_14], %25 {strides = array<i32>} : memref<1x1x256xf32, #tpu.memory_space<vmem>>, vector<1x1x256xf32>,
    return
  }
  func.func @transform_0(%arg0: i32, %arg1: i32) -> (i32, i32, i32) {
    %c0_i32 = arith.constant 0 : i32
    %c0_i32_0 = arith.constant 0 : i32
    return %arg0, %c0_i32, %arg1 : i32, i32, i32
  }
  func.func @transform_1(%arg0: i32, %arg1: i32) -> (i32, i32, i32) {
    %c0_i32 = arith.constant 0 : i32
    %c0_i32_0 = arith.constant 0 : i32
    return %arg0, %c0_i32, %arg1 : i32, i32, i32
  }
  func.func @transform_2(%arg0: i32, %arg1: i32) -> (i32, i32, i32) {
    %c0_i32 = arith.constant 0 : i32
    %c0_i32_0 = arith.constant 0 : i32
    %c0_i32_1 = arith.constant 0 : i32
    return %arg0, %c0_i32, %c0_i32_0 : i32, i32, i32
  }
}

</mosaic_0001>

<llo_original>
// kernel: tpu_custom_call.1
$region0: #{tpu_custom_call.1}
  #allocation0 [shape = 'u32[]', space=smem, size = 0x4, offset = 0x4, fixed_abs, tag = 'smem constant byte address 0x4 - core index']
  #allocation1 [shape = 'u32[144,128]{1,0:T(1,128)}', space=vmem, size = 0x12000, scoped, tag = 'internal scratch']
  %s0 = inlined_call_operand.hbm [shape: f32[2,4,256], index: 0, kind: input, shape index: {}]
  %s1 = inlined_call_operand.hbm [shape: s32[2,1,256], index: 1, kind: input, shape index: {}]
  %s2 = inlined_call_operand.hbm [shape: f32[2,1,256], index: 2, kind: output, shape index: {}]
  %s3 = sld [smem:[#allocation0]]
  $region53: #{tpu_custom_call.1} parent=0
    _
  %s5 = ssub.s32 1, %s3
  %s6 = scalar_select 0, %s5, %s3
  $region1: #{tpu_custom_call.1} parent=0
    #allocation2 [shape = 'u8[8192]{0}', space=vmem, size = 0x2000, scoped, tag = 'input window, operand 0']
    #allocation3 [shape = 's32[2]{0}', space=sflag, size = 0x8, scoped, tag = 'scoped memory for tpu_custom_call.1']
    #allocation4 [shape = 's32[2]{0}', space=sflag, size = 0x8, scoped, tag = 'scoped memory for tpu_custom_call.1']
    #allocation5 [shape = 'u8[2048]{0}', space=vmem, size = 0x800, scoped, tag = 'input window, operand 1']
    #allocation6 [shape = 's32[2]{0}', space=sflag, size = 0x8, scoped, tag = 'scoped memory for tpu_custom_call.1']
    #allocation7 [shape = 'u8[2048]{0}', space=vmem, size = 0x800, scoped, tag = 'output window, operand 0']
    %7 = vsyncpa [#allocation3], 0
    %s8 = scalar_lea.sflag [#allocation3], 1
    %9 = vsyncpa %s8, 0
    %10 = vsyncpa [#allocation6], 0
    %s11 = scalar_lea.sflag [#allocation6], 1
    %12 = vsyncpa %s11, 0
    %13 = vsyncpa [#allocation4], 0
    %s14 = scalar_lea.sflag [#allocation4], 1
    %15 = vsyncpa %s14, 0
    loop: start=0, step=1, limit=4
    $region2: #{tpu_custom_call.1} parent=1 // loop_pre_header
      _
    $region3: #{tpu_custom_call.1} parent=1 // loop_header
      %s17 = sphi 0, %s21
      %p18 = scmp.ge.s32.totalorder %s17, 4
      %s24 = sphi 0, %s36
      %s25 = sphi 0, %s32
      %s26 = sphi 0, %s24
      %s27 = sphi 0, %s25
      %s28 = sphi 0, %s26
      %s29 = sphi 0, %s27
      %s41 = sphi 0, %s43
      %s44 = sphi 0, %s41
      %s45 = sphi 0, %s44
      %s61 = sphi 0, %s45
      %s69 = sphi 0, %s71
      %s72 = sphi 0, %s69
      %s73 = sphi 0, %s72
      %s89 = sphi 0, %s73
      %s95 = sphi 0, %s97
      %s98 = sphi 0, %s95
      %s99 = sphi 0, %s98
      %s115 = sphi 0, %s99
    $region4: #{tpu_custom_call.1} parent=1 // loop_header_branch
      %20 = sbr.rel (%p18) target = $region8
    $region5: #{tpu_custom_call.1} parent=1 // loop_body
      %s22 = ssub.s32 %s17, 1
      %s23 = ssub.s32 %s17, 2
      %s30 = sadd.s32 1, %s25
      %p31 = scmp.ge.s32.totalorder %s30, 1
      %s32 = scalar_select %p31, 0, %s30
      %s33 = sadd.s32 1, %s24
      %s34 = scalar_select %p31, %s33, %s24
      %p35 = scmp.ge.s32.totalorder %s34, 2
      %s36 = scalar_select %p35, 0, %s34
      %s37 = ssub.s32 %s24, %s36
      %s38 = ssub.s32 %s25, %s32
      %s39 = sor.u32 %s37, %s38
      %p40 = scmp.eq.s32.totalorder %s39, 0
      %s42 = sadd.s32 %s41, 1
      %s43 = scalar_select %p40, %s41, %s42
      %p46 = pneg %p40
      %p47 = scmp.eq.s32.totalorder %s17, 1
      %p48 = por %p46, %p47
      %p49 = scmp.ne.s32.totalorder %s41, %s44
      %p50 = scmp.eq.s32.totalorder %s17, 0
      %p51 = por %p49, %p50
      %p52 = scmp.ne.s32.totalorder %s41, %s44
      %p53 = scmp.eq.s32.totalorder %s22, 1
      %p54 = por %p52, %p53
      %p55 = scmp.ne.s32.totalorder %s44, %s45
      %p56 = scmp.eq.s32.totalorder %s22, 0
      %p57 = por %p55, %p56
      %p58 = scmp.ne.s32.totalorder %s44, %s45
      %p59 = scmp.eq.s32.totalorder %s23, 1
      %p60 = por %p58, %p59
      %p62 = scmp.ne.s32.totalorder %s45, %s61
      %p63 = scmp.eq.s32.totalorder %s23, 0
      %p64 = por %p62, %p63
      %s65 = ssub.s32 %s24, %s36
      %s66 = ssub.s32 %s25, %s32
      %s67 = sor.u32 %s65, %s66
      %p68 = scmp.eq.s32.totalorder %s67, 0
      %s70 = sadd.s32 %s69, 1
      %s71 = scalar_select %p68, %s69, %s70
      %p74 = pneg %p68
      %p75 = scmp.eq.s32.totalorder %s17, 1
      %p76 = por %p74, %p75
      %p77 = scmp.ne.s32.totalorder %s69, %s72
      %p78 = scmp.eq.s32.totalorder %s17, 0
      %p79 = por %p77, %p78
      %p80 = scmp.ne.s32.totalorder %s69, %s72
      %p81 = scmp.eq.s32.totalorder %s22, 1
      %p82 = por %p80, %p81
      %p83 = scmp.ne.s32.totalorder %s72, %s73
      %p84 = scmp.eq.s32.totalorder %s22, 0
      %p85 = por %p83, %p84
      %p86 = scmp.ne.s32.totalorder %s72, %s73
      %p87 = scmp.eq.s32.totalorder %s23, 1
      %p88 = por %p86, %p87
      %p90 = scmp.ne.s32.totalorder %s73, %s89
      %p91 = scmp.eq.s32.totalorder %s23, 0
      %p92 = por %p90, %p91
      %s93 = ssub.s32 %s24, %s36
      %p94 = scmp.eq.s32.totalorder %s93, 0
      %s96 = sadd.s32 %s95, 1
      %s97 = scalar_select %p94, %s95, %s96
      %p100 = pneg %p94
      %p101 = scmp.eq.s32.totalorder %s17, 1
      %p102 = por %p100, %p101
      %p103 = scmp.ne.s32.totalorder %s95, %s98
      %p104 = scmp.eq.s32.totalorder %s17, 0
      %p105 = por %p103, %p104
      %p106 = scmp.ne.s32.totalorder %s95, %s98
      %p107 = scmp.eq.s32.totalorder %s22, 1
      %p108 = por %p106, %p107
      %p109 = scmp.ne.s32.totalorder %s98, %s99
      %p110 = scmp.eq.s32.totalorder %s22, 0
      %p111 = por %p109, %p110
      %p112 = scmp.ne.s32.totalorder %s98, %s99
      %p113 = scmp.eq.s32.totalorder %s23, 1
      %p114 = por %p112, %p113
      %p116 = scmp.ne.s32.totalorder %s99, %s115
      %p117 = scmp.eq.s32.totalorder %s23, 0
      %p118 = por %p116, %p117
      %p119 = scmp.le.s32.totalorder 1, %s17
      %p120 = scmp.lt.s32.totalorder %s17, 3
      %p121 = pnand %p119, %p120
      %p122 = pneg %p121
      // Predicated region
      $region9: #{tpu_custom_call.1} parent=5 // pred_check
        _
      $region10: #{tpu_custom_call.1} parent=5 // pred_check_branch
        %124 = sbr.rel (%p121) target = $region12
      $region11: #{tpu_custom_call.1} parent=5 // pred_region
        %s125 = ssub.s32 %s17, 1
      $region12: #{tpu_custom_call.1} parent=5 // pred_fallthru
        _
      %p126 = scmp.lt.s32.totalorder %s17, 2
      // Predicated region
      $region13: #{tpu_custom_call.1} parent=5 // pred_check
        %p127 = pneg %p126
      $region14: #{tpu_custom_call.1} parent=5 // pred_check_branch
        %129 = sbr.rel (%p127) target = $region16
      $region15: #{tpu_custom_call.1} parent=5 // pred_region
        // Predicated region
        $region17: #{tpu_custom_call.1} parent=15 // pred_check
          %p130 = pneg %p51
        $region18: #{tpu_custom_call.1} parent=15 // pred_check_branch
          %132 = sbr.rel (%p130) target = $region20
        $region19: #{tpu_custom_call.1} parent=15 // pred_region
          %s133 = sand.u32 %s41, 1
          %s134 = scalar_lea.sflag [#allocation3], %s133
          %s135 = sand.u32 %s41, 1
          %s136 = smul.addr %s135, 8
          %s137 = scalar_lea.vmem [#allocation2], %s136
          %s138 = smul.u32 2, %s25
          %s140 = ssub.s32 128, 128
          %141 = vsyncadd %s134, %s140
          %s142 = smul.addr %s24, 2
          %s143 = sadd.s32 %s138, %s142
          %s144 = smul.addr %s143, 64
          %s145 = scalar_lea.hbm %s0, %s144
          %s147 = sshll.u32 %s137, 4
          %s148 = int_to_ptr.vmem [resolvable:$true] %s147
          %150 = dma.hbm_to_vmem [thread:$0]  %s145, 128, %s148, %s134
        $region20: #{tpu_custom_call.1} parent=15 // pred_fallthru
          _
        // Predicated region
        $region21: #{tpu_custom_call.1} parent=15 // pred_check
          %p151 = pneg %p79
        $region22: #{tpu_custom_call.1} parent=15 // pred_check_branch
          %153 = sbr.rel (%p151) target = $region24
        $region23: #{tpu_custom_call.1} parent=15 // pred_region
          %s154 = sand.u32 %s69, 1
          %s155 = scalar_lea.sflag [#allocation6], %s154
          %s156 = sand.u32 %s69, 1
          %s157 = smul.addr %s156, 2
          %s158 = scalar_lea.vmem [#allocation5], %s157
          %s159 = smul.u32 2, %s25
          %s161 = ssub.s32 32, 32
          %162 = vsyncadd %s155, %s161
          %s163 = smul.addr %s24, 2
          %s164 = sadd.s32 %s159, %s163
          %s165 = smul.addr %s164, 16
          %s166 = scalar_lea.hbm %s1, %s165
          %s168 = sshll.u32 %s158, 4
          %s169 = int_to_ptr.vmem [resolvable:$true] %s168
          %171 = dma.hbm_to_vmem [thread:$0]  %s166, 32, %s169, %s155
        $region24: #{tpu_custom_call.1} parent=15 // pred_fallthru
          _
      $region16: #{tpu_custom_call.1} parent=5 // pred_fallthru
        _
      %p172 = scmp.le.s32.totalorder 1, %s17
      %p173 = scmp.lt.s32.totalorder %s17, 3
      %p174 = pnand %p172, %p173
      %p175 = pneg %p174
      // Predicated region
      $region25: #{tpu_custom_call.1} parent=5 // pred_check
        _
      $region26: #{tpu_custom_call.1} parent=5 // pred_check_branch
        %177 = sbr.rel (%p174) target = $region28
      $region27: #{tpu_custom_call.1} parent=5 // pred_region
        %s178 = ssub.s32 %s17, 1
        %s179 = sand.u32 %s44, 1
        %s180 = scalar_lea.sflag [#allocation3], %s179
        %s181 = sand.u32 %s44, 1
        %s182 = smul.addr %s181, 8
        %s183 = scalar_lea.vmem [#allocation2], %s182
        // Predicated region
        $region29: #{tpu_custom_call.1} parent=27 // pred_check
          %p184 = pneg %p57
        $region30: #{tpu_custom_call.1} parent=27 // pred_check_branch
          %186 = sbr.rel (%p184) target = $region32
        $region31: #{tpu_custom_call.1} parent=27 // pred_region
          %187 = dma.done %s180, 128
        $region32: #{tpu_custom_call.1} parent=27 // pred_fallthru
          _
        %s188 = sand.u32 %s72, 1
        %s189 = scalar_lea.sflag [#allocation6], %s188
        %s190 = sand.u32 %s72, 1
        %s191 = smul.addr %s190, 2
        %s192 = scalar_lea.vmem [#allocation5], %s191
        // Predicated region
        $region33: #{tpu_custom_call.1} parent=27 // pred_check
          %p193 = pneg %p85
        $region34: #{tpu_custom_call.1} parent=27 // pred_check_branch
          %195 = sbr.rel (%p193) target = $region36
        $region35: #{tpu_custom_call.1} parent=27 // pred_region
          %196 = dma.done %s189, 32
        $region36: #{tpu_custom_call.1} parent=27 // pred_fallthru
          _
        %s197 = sand.u32 %s44, 1
        %s198 = scalar_lea.sflag [#allocation3], %s197
        %s199 = sand.u32 %s44, 1
        %s200 = smul.addr %s199, 8
        %s201 = scalar_lea.vmem [#allocation2], %s200
        %p202 = pneg %p57
        %p203 = pneg %p54
        %s204 = sand.u32 %s72, 1
        %s205 = scalar_lea.sflag [#allocation6], %s204
        %s206 = sand.u32 %s72, 1
        %s207 = smul.addr %s206, 2
        %s208 = scalar_lea.vmem [#allocation5], %s207
        %p209 = pneg %p85
        %p210 = pneg %p82
        %p211 = pneg %p111
        %p212 = pneg %p108
        %s213 = sand.u32 %s98, 1
        %s214 = scalar_lea.sflag [#allocation4], %s213
        %s215 = sand.u32 %s98, 1
        %s216 = smul.addr %s215, 2
        %s217 = scalar_lea.vmem [#allocation7], %s216
        %s218 = smul.u32 2, %s27
        %s219 = smul.u32 2, %s27
        %p220 = scmp.eq.s32.totalorder %s27, 0
        // Predicated region
        $region37: #{tpu_custom_call.1} parent=27 // pred_check
          %p221 = pneg %p220
        $region38: #{tpu_custom_call.1} parent=27 // pred_check_branch
          %223 = sbr.rel (%p221) target = $region40
        $region39: #{tpu_custom_call.1} parent=27 // pred_region
          %v224 = vlaneseq
          %vm225 = vcmp.ge.s32.totalorder %v224, 0
          %vm226 = vcmp.lt.s32.totalorder %v224, 256
          %vm227 = vmand %vm225, %vm226
          %228 = vst.msk [vmem:[%s217] sm:$0x3] %vm227, 0.0
        $region40: #{tpu_custom_call.1} parent=27 // pred_fallthru
          _
        %v229 = vld [vmem:[%s183] sm:$0xff]
        %v230 = vld [vmem:[%s192] sm:$0x3]
        %v231 = vlaneseq
        %v232 = vshrl.u32 %v231, 7
        %v233 = vlaneseq
        %v234 = vshrl.u32 %v233, 7
        %v235 = vsub.s32 0, %v234
        %v236 = vrot.slane %v230, %v235
        %v237 = vlaneseq
        %v238 = vshrl.u32 %v237, 7
        %v239 = vsub.s32 1, %v238
        %v240 = vrot.slane %v230, %v239
        %vm241 = vcmp.eq.s32.totalorder %v232, %v236
        %vm242 = vcmp.eq.s32.totalorder %v232, %v240
        %v244 = vcombine.high %v229, %v229
        %v246 = vsel %vm241, %v229, 0.0
        %v247 = vsel %vm242, %v244, 0.0
        %vm248 = vcmask 1043456
        %v249 = vsel %vm248, %v246, 0.0
        %v250 = vrot.slane %v249, 4
        %v251 = vadd.f32 %v249, %v250
        %v252 = vrot.slane %v251, 2
        %v253 = vadd.f32 %v251, %v252
        %v254 = vrot.slane %v253, 1
        %v255 = vadd.f32 %v253, %v254
        %v256 = vsel %vm248, %v247, 0.0
        %v257 = vrot.slane %v256, 4
        %v258 = vadd.f32 %v256, %v257
        %v259 = vrot.slane %v258, 2
        %v260 = vadd.f32 %v258, %v259
        %v261 = vrot.slane %v260, 1
        %v262 = vadd.f32 %v260, %v261
        %v263 = vmul.f32 %v255, 1.442695
        %v264 = vpow.pop %v263
        %v265 = vmul.f32 %v262, 1.442695
        %v266 = vpow.pop %v265
        %v267 = vsub.f32 1.0, %v264
        %v268 = vsub.f32 1.0, %v266
        %v269 = vmul.f32 %v267, %v267
        %v270 = vmul.f32 %v268, %v268
        %v271 = vmul.f32 %v269, %v269
        %v272 = vmul.f32 %v270, %v270
        %v273 = vmul.f32 %v269, %v271
        %v274 = vmul.f32 %v270, %v272
        %v275 = vmul.f32 %v273, -1.0
        %v276 = vmul.f32 %v274, -1.0
        %v277 = vmul.f32 %v275, %v255
        %v278 = vmul.f32 %v276, %v262
        %v279 = vld [vmem:[%s217] sm:$0x3]
        %v282 = vcombine.low %v277, %v278
        %v284 = vunpack.c.l.s4 1966171168
        %v285 = vunpack.c.0.s8 %v284
        %v286 = vlaneseq
        %v287 = vshrl.u32 %v286, 7
        %v288 = vsub.s32 %v285, %v287
        %v289 = vrot.slane %v282, %v288
        %v291 = vunpack.c.l.s4 1966171168
        %v292 = vunpack.c.0.s8 %v291
        %v293 = vlaneseq
        %v294 = vshrl.u32 %v293, 7
        %v295 = vsub.s32 %v292, %v294
        %v296 = vrot.slane %v289, %v295
        %v298 = vadd.f32 %v279, %v296
        %v299 = vlaneseq
        %vm300 = vcmp.ge.s32.totalorder %v299, 0
        %vm301 = vcmp.lt.s32.totalorder %v299, 256
        %vm302 = vmand %vm300, %vm301
        %303 = vst.msk [vmem:[%s217] sm:$0x3] %vm302, %v298
        %s304 = sand.u32 %s98, 1
        %s305 = scalar_lea.sflag [#allocation4], %s304
        %s306 = sand.u32 %s98, 1
        %s307 = smul.addr %s306, 2
        %s308 = scalar_lea.vmem [#allocation7], %s307
        // Predicated region
        $region41: #{tpu_custom_call.1} parent=27 // pred_check
          %p309 = pneg %p108
        $region42: #{tpu_custom_call.1} parent=27 // pred_check_branch
          %311 = sbr.rel (%p309) target = $region44
        $region43: #{tpu_custom_call.1} parent=27 // pred_region
          %s313 = ssub.s32 32, 32
          %314 = vsyncadd %s305, %s313
          %s315 = smul.addr %s26, 2
          %s316 = smul.addr %s315, 16
          %s317 = scalar_lea.hbm %s2, %s316
          %s319 = sshll.u32 %s308, 4
          %s320 = int_to_ptr.vmem [resolvable:$true] %s319
          %322 = dma.vmem_to_hbm [thread:$0]  %s320, 32, %s317, %s305
        $region44: #{tpu_custom_call.1} parent=27 // pred_fallthru
          _
      $region28: #{tpu_custom_call.1} parent=5 // pred_fallthru
        _
      %p323 = scmp.le.s32.totalorder 2, %s17
      // Predicated region
      $region45: #{tpu_custom_call.1} parent=5 // pred_check
        %p324 = pneg %p323
      $region46: #{tpu_custom_call.1} parent=5 // pred_check_branch
        %326 = sbr.rel (%p324) target = $region48
      $region47: #{tpu_custom_call.1} parent=5 // pred_region
        %s327 = ssub.s32 %s17, 2
        // Predicated region
        $region49: #{tpu_custom_call.1} parent=47 // pred_check
          %p328 = pneg %p114
        $region50: #{tpu_custom_call.1} parent=47 // pred_check_branch
          %330 = sbr.rel (%p328) target = $region52
        $region51: #{tpu_custom_call.1} parent=47 // pred_region
          %s331 = sand.u32 %s99, 1
          %s332 = scalar_lea.sflag [#allocation4], %s331
          %s333 = sand.u32 %s99, 1
          %s334 = smul.addr %s333, 2
          %s335 = scalar_lea.vmem [#allocation7], %s334
          %336 = dma.done %s332, 32
        $region52: #{tpu_custom_call.1} parent=47 // pred_fallthru
          _
      $region48: #{tpu_custom_call.1} parent=5 // pred_fallthru
        _
    $region6: #{tpu_custom_call.1} parent=1 // loop_footer
      %s21 = sadd.s32 1, %s17
    $region7: #{tpu_custom_call.1} parent=1 // loop_footer_branch
      %16 = sbr.rel target = $region3
    $region8: #{tpu_custom_call.1} parent=1 // loop_exit
      _
    %337 = vsyncpa [#allocation3], 1
    %s338 = scalar_lea.sflag [#allocation3], 1
    %339 = vsyncpa %s338, 1
    %340 = vsyncpa [#allocation6], 1
    %s341 = scalar_lea.sflag [#allocation6], 1
    %342 = vsyncpa %s341, 1
    %343 = vsyncpa [#allocation4], 1
    %s344 = scalar_lea.sflag [#allocation4], 1
    %345 = vsyncpa %s344, 1

</llo_original>
